<compile_context>
chip_gen: v7x
topology: tpu7x:2x2x1
jax: 0.10.0
libtpu: 0.0.40
codegen_flags: <defaults>
</compile_context>

<pallas_src>
import functools
import math

import jax
import jax.numpy as jnp
from jax.experimental import pallas as pl
from jax.experimental.pallas import tpu as pltpu


def _grouped_rel_pos_kernel(c_ref, o_ref, *, tile_rows, start, split, fold,
                            max_len, gs_mod):
    """Compute one (tile_rows, C) slab of the folded sinusoidal table.

    c_ref: (8, C) f32 constants — row 0 inv_freq, row 1 phase, row 2 rowoff
           (rowoff[c] = c // dim_model, used to un-fold the row index).
    o_ref: (tile_rows, C) output slab; C = fold * dim_model (lane-dense).
    """
    tr, _ = o_ref.shape
    consts = c_ref[...]                    # (8, C)
    inv_freq = consts[0:1, :]              # (1, C)
    phase = consts[1:2, :]                 # (1, C)
    rowoff = consts[2:3, :]                # (1, C)  float(c // D)

    i = pl.program_id(0)
    # local folded row index within this tile -> (tr, 1) f32
    rr = jax.lax.broadcasted_iota(jnp.int32, (tr, 1), 0).astype(jnp.float32)
    base = (i * tile_rows).astype(jnp.float32)
    # global index n into the full relative-position vector, per element
    n = (base + rr) * float(fold) + float(start) + rowoff      # (tr, C)

    pos = float(max_len - 1) - n
    if gs_mod == 0:
        # even group_size: the "right context" half starts one step later
        # (duplicated 0 position), i.e. pos = max_len - n for n >= split.
        pos = jnp.where(n >= float(split), pos + 1.0, pos)

    # even columns: sin(pos * inv_freq); odd columns: cos = sin(. + pi/2)
    angle = pos * inv_freq + phase
    o_ref[...] = jnp.sin(angle).astype(o_ref.dtype)


def grouped_rel_sin_pos_encoding(max_len, dim_model, group_size=1, causal=False,
                                 batch_size=1, seq_len=None, hidden_len=0,
                                 dtype=jnp.float32):
    """Pallas equivalent of GroupedRelativeSinusoidalPositionalEncoding.forward."""
    assert dim_model % 2 == 0, "dim_model must be even (as in the PyTorch module)"
    gs_mod = group_size % 2
    total = 2 * max_len - gs_mod

    # ---- static slice bounds, identical to the PyTorch forward ----
    if causal:
        if seq_len is not None:
            start, stop = max_len - seq_len - hidden_len, max_len
        else:
            start, stop = 0, max_len
    elif seq_len is not None:
        start = max_len - seq_len + group_size // 2 - hidden_len
        stop = max_len - gs_mod + seq_len - group_size // 2
    else:
        start, stop = 0, total
    L = stop - start
    D = dim_model
    split = max_len - gs_mod          # where the right-context half begins

    # ---- fold rows so the stored last dim is a multiple of 128 when D < 128 ----
    fold = (128 // D) if (D < 128 and 128 % D == 0) else 1
    C = fold * D

    # ---- tiny per-column constants (computed once, wrapper-side) ----
    jcol = jnp.arange(D)
    inv_freq = jnp.power(
        jnp.float32(10000.0),
        -(2.0 * (jcol // 2).astype(jnp.float32) / float(D)))
    phase = (jcol % 2).astype(jnp.float32) * jnp.float32(math.pi / 2.0)
    rowoff = jnp.repeat(jnp.arange(fold, dtype=jnp.float32), D)        # (C,)
    consts = jnp.stack([jnp.tile(inv_freq, fold), jnp.tile(phase, fold), rowoff], 0)
    consts = jnp.concatenate([consts, jnp.zeros((5, C), jnp.float32)], 0)  # (8, C)

    # ---- tile the (folded) row axis; double-buffered block <= ~8 MiB ----
    lf_needed = pl.cdiv(L, fold)
    tr = max(8, min(1024, ((4 * 1024 * 1024) // (C * 4)) // 8 * 8))
    tr = min(tr, pl.cdiv(lf_needed, 8) * 8)
    lf_pad = pl.cdiv(lf_needed, tr) * tr
    grid = (lf_pad // tr,)

    kernel = functools.partial(
        _grouped_rel_pos_kernel, tile_rows=tr, start=start, split=split,
        fold=fold, max_len=max_len, gs_mod=gs_mod)

    folded = pl.pallas_call(
        kernel,
        out_shape=jax.ShapeDtypeStruct((lf_pad, C), dtype),
        grid=grid,
        in_specs=[pl.BlockSpec((8, C), lambda i: (0, 0))],
        out_specs=pl.BlockSpec((tr, C), lambda i: (i, 0)),
        compiler_params=pltpu.CompilerParams(
            dimension_semantics=("parallel",)),
    )(consts)

    # un-fold, drop padded rows, broadcast over batch outside the kernel
    enc = folded.reshape(lf_pad * fold, D)[:L]                 # (L, D)
    return jnp.broadcast_to(enc[None], (batch_size, L, D))     # (B, L, D)


def _reference(max_len, dim_model, group_size, causal, batch_size, seq_len,
               hidden_len):
    """Pure-JAX port of the PyTorch module, for verification."""
    gs_mod = group_size % 2
    pos_left = jnp.arange(max_len - 1, gs_mod - 1, -1, dtype=jnp.float32)
    pos_right = jnp.arange(0, -max_len, -1, dtype=jnp.float32)
    pos = jnp.concatenate([pos_left, pos_right], axis=0)[:, None]
    k = jnp.arange(0, dim_model // 2, dtype=jnp.float32)[None, :]
    angles = pos / 10000.0 ** (2.0 * k / dim_model)
    table = jnp.zeros((2 * max_len - gs_mod, dim_model), jnp.float32)
    table = table.at[:, 0::2].set(jnp.sin(angles))
    table = table.at[:, 1::2].set(jnp.cos(angles))
    table = table[None]
    if causal:
        if seq_len is not None:
            R = table[:, max_len - seq_len - hidden_len:max_len]
        else:
            R = table[:, :max_len]
    elif seq_len is not None:
        R = table[:, max_len - seq_len + group_size // 2 - hidden_len:
                  max_len - gs_mod + seq_len - group_size // 2]
    else:
        R = table
    return jnp.tile(R, (batch_size, 1, 1))


if __name__ == "__main__":
    # Module has no learned parameters / randomness; PRNG key unused but built
    # for spec compliance.
    _ = jax.random.PRNGKey(0)

    configs = [
        # standard non-causal, odd group size (output L = 2*seq_len - 1)
        dict(max_len=16, dim_model=32, group_size=1, causal=False,
             batch_size=2, seq_len=8, hidden_len=0),
        # even group size (exercises the duplicated-0 / split correction path)
        dict(max_len=16, dim_model=32, group_size=2, causal=False,
             batch_size=2, seq_len=8, hidden_len=0),
        # causal branch
        dict(max_len=16, dim_model=32, group_size=1, causal=True,
             batch_size=2, seq_len=8, hidden_len=0),
    ]

    for cfg in configs:
        R = jax.block_until_ready(grouped_rel_sin_pos_encoding(**cfg))
        R_ref = _reference(**cfg)
        assert R.shape == R_ref.shape, (R.shape, R_ref.shape)
        # slightly loose tolerance: cos(x) is computed as sin(x + pi/2)
        assert jnp.allclose(R, R_ref, atol=2e-5), ("mismatch vs reference", cfg)

    assert R.shape[1] == 8  # causal: L = seq_len
    print("KERNEL_OK")
</pallas_src>

<mosaic_0001>
module attributes {stable_mosaic.version = 11 : i64} {
  func.func @_grouped_rel_pos_kernel(%arg0: i32, %arg1: memref<8x128xf32, #tpu.memory_space<vmem>>, %arg2: memref<8x128xf32, #tpu.memory_space<vmem>>) attributes {dimension_semantics = [#tpu.dimension_semantics<parallel>], iteration_bounds = array<i64: 1>, scalar_prefetch = 0 : i64, scratch_operands = 0 : i64, tpu.core_type = #tpu.core_type<tc>, window_params = [{pipeline_mode = #tpu.pipeline_mode<synchronous>, transform_indices = @transform_0, window_bounds = array<i64: 8, 128>}, {transform_indices = @transform_1, window_bounds = array<i64: 8, 128>}]} {
    %c0 = arith.constant 0 : index
    %c0_0 = arith.constant 0 : index
    %0 = vector.load %arg1[%c0, %c0_0] : memref<8x128xf32, #tpu.memory_space<vmem>>, vector<8x128xf32>
    %1 = vector.extract_strided_slice %0 {offsets = [0, 0], sizes = [1, 128], strides = [1, 1]} : vector<8x128xf32> to vector<1x128xf32>
    %2 = vector.extract_strided_slice %0 {offsets = [1, 0], sizes = [1, 128], strides = [1, 1]} : vector<8x128xf32> to vector<1x128xf32>
    %3 = vector.extract_strided_slice %0 {offsets = [2, 0], sizes = [1, 128], strides = [1, 1]} : vector<8x128xf32> to vector<1x128xf32>
    %4 = tpu.iota {dimensions = array<i32: 0>} : vector<8x1xi32>
    %5 = arith.sitofp %4 : vector<8x1xi32> to vector<8x1xf32>
    %c8_i32 = arith.constant 8 : i32
    %6 = arith.muli %arg0, %c8_i32 : i32
    %7 = arith.sitofp %6 : i32 to f32
    %8 = vector.broadcast %7 : f32 to vector<8x1xf32>
    %9 = arith.addf %8, %5 : vector<8x1xf32>
    %cst = arith.constant 4.000000e+00 : f32
    %10 = vector.broadcast %cst : f32 to vector<8x1xf32>
    %11 = arith.mulf %9, %10 : vector<8x1xf32>
    %cst_1 = arith.constant 8.000000e+00 : f32
    %12 = vector.broadcast %cst_1 : f32 to vector<8x1xf32>
    %13 = arith.addf %11, %12 : vector<8x1xf32>
    %14 = vector.broadcast %13 : vector<8x1xf32> to vector<8x128xf32>
    %15 = vector.broadcast %3 : vector<1x128xf32> to vector<8x128xf32>
    %16 = arith.addf %14, %15 : vector<8x128xf32>
    %cst_2 = arith.constant 1.500000e+01 : f32
    %17 = vector.broadcast %cst_2 : f32 to vector<8x128xf32>
    %18 = arith.subf %17, %16 : vector<8x128xf32>
    %19 = vector.broadcast %1 : vector<1x128xf32> to vector<8x128xf32>
    %20 = arith.mulf %18, %19 : vector<8x128xf32>
    %21 = vector.broadcast %2 : vector<1x128xf32> to vector<8x128xf32>
    %22 = arith.addf %20, %21 : vector<8x128xf32>
    %23 = math.sin %22 : vector<8x128xf32>
    %c0_3 = arith.constant 0 : index
    %c0_4 = arith.constant 0 : index
    %24 = vector.load %arg2[%c0_3, %c0_4] : memref<8x128xf32, #tpu.memory_space<vmem>>, vector<8x128xf32>
    tpu.vector_store %arg2[%c0_3, %c0_4], %23 {strides = array<i32>} : memref<8x128xf32, #tpu.memory_space<vmem>>, vector<8x128xf32>,
    return
  }
  func.func @transform_0(%arg0: i32) -> (i32, i32) {
    %c0_i32 = arith.constant 0 : i32
    %c0_i32_0 = arith.constant 0 : i32
    %c0_i32_1 = arith.constant 0 : i32
    return %c0_i32, %c0_i32_0 : i32, i32
  }
  func.func @transform_1(%arg0: i32) -> (i32, i32) {
    %c0_i32 = arith.constant 0 : i32
    %c0_i32_0 = arith.constant 0 : i32
    return %arg0, %c0_i32 : i32, i32
  }
}

</mosaic_0001>

<llo_original>
// kernel: tpu_custom_call.1
$region0: #{tpu_custom_call.1}
  #allocation0 [shape = 'u32[]', space=smem, size = 0x4, offset = 0x4, fixed_abs, tag = 'smem constant byte address 0x4 - core index']
  #allocation1 [shape = 'u32[144,128]{1,0:T(1,128)}', space=vmem, size = 0x12000, scoped, tag = 'internal scratch']
  %s0 = inlined_call_operand.hbm [shape: f32[8,128], index: 0, kind: input, shape index: {}]
  %s1 = inlined_call_operand.hbm [shape: f32[8,128], index: 1, kind: output, shape index: {}]
  %s2 = sld [smem:[#allocation0]]
  $region18: #{tpu_custom_call.1} parent=0
    _
  %s4 = ssub.s32 1, %s2
  %s5 = scalar_select 0, %s4, %s2
  $region1: #{tpu_custom_call.1} parent=0
    #allocation2 [shape = 'u8[4096]{0}', space=vmem, size = 0x1000, scoped, tag = 'input window, operand 0, single buffered']
    #allocation3 [shape = 's32[1]{0}', space=sflag, size = 0x4, scoped, tag = 'scoped memory for tpu_custom_call.1']
    #allocation4 [shape = 's32[1]{0}', space=sflag, size = 0x4, scoped, tag = 'scoped memory for tpu_custom_call.1']
    #allocation5 [shape = 'u8[4096]{0}', space=vmem, size = 0x1000, scoped, tag = 'output window, operand 0, single buffered']
    %6 = vsyncpa [#allocation3], 0
    %7 = vsyncpa [#allocation4], 0
    // Predicated region
    $region2: #{tpu_custom_call.1} parent=1 // pred_check
      _
    $region3: #{tpu_custom_call.1} parent=1 // pred_check_branch
      %9 = sbr.rel (0) target = $region5
    $region4: #{tpu_custom_call.1} parent=1 // pred_region
      %s11 = ssub.s32 128, 128
      %12 = vsyncadd [#allocation3], %s11
      %s14 = sshll.u32 [#allocation2], 4
      %s15 = int_to_ptr.vmem [resolvable:$true] %s14
      %17 = dma.hbm_to_vmem [thread:$0]  %s0, 128, %s15, [#allocation3]
    $region5: #{tpu_custom_call.1} parent=1 // pred_fallthru
      _
    // Predicated region
    $region6: #{tpu_custom_call.1} parent=1 // pred_check
      _
    $region7: #{tpu_custom_call.1} parent=1 // pred_check_branch
      %19 = sbr.rel (0) target = $region9
    $region8: #{tpu_custom_call.1} parent=1 // pred_region
      %20 = dma.done [#allocation3], 128
    $region9: #{tpu_custom_call.1} parent=1 // pred_fallthru
      _
    %v21 = vld [vmem:[#allocation2] sm:$0xff]
    %v22 = vlaneseq
    %v23 = vshrl.u32 %v22, 7
    %v24 = vcvt.s32.f32 %v23
    %s25 = smul.u32 0, 8
    %s26 = scvt.s32.f32 %s25
    %v27 = vstv %s26
    %v28 = vadd.f32 %v27, %v24
    %v29 = vmul.f32 %v28, 4.0
    %v30 = vadd.f32 %v29, 8.0
    %v31 = vlaneseq
    %v32 = vshrl.u32 %v31, 7
    %v33 = vsub.s32 2, %v32
    %v34 = vrot.slane %v21, %v33
    %v35 = vadd.f32 %v30, %v34
    %v36 = vsub.f32 15.0, %v35
    %v37 = vlaneseq
    %v38 = vshrl.u32 %v37, 7
    %v39 = vsub.s32 0, %v38
    %v40 = vrot.slane %v21, %v39
    %v41 = vmul.f32 %v36, %v40
    %v42 = vlaneseq
    %v43 = vshrl.u32 %v42, 7
    %v44 = vsub.s32 1, %v43
    %v45 = vrot.slane %v21, %v44
    %v46 = vadd.f32 %v41, %v45
    %v47 = vand.u32 2147483647, %v46
    %vm48 = vcmp.le.f32.partialorder %v47, 0.7853982
    %vm49 = vcmp.lt.s32.totalorder %v46, 0
    %v50 = vand.u32 %v46, 2139095040
    %v51 = vshrl.u32 %v50, 23
    %v52 = vsub.s32 %v51, 127
    %v53 = vand.u32 2147483647, %v46
    %v54 = vand.u32 %v53, 8388607
    %v55 = vor.u32 %v54, 8388608
    %v56 = vsub.s32 0, %v55
    %v57 = vadd.s32 %v52, 1
    %vm58 = vcmp.gt.s32.totalorder %v57, 0
    %v59 = vsel %vm58, %v57, 0
    %v60 = vshrl.u32 %v59, 5
    %v61 = vand.u32 %v59, 31
    %v62 = vsub.s32 32, %v61
    %v63 = vshrl.u32 683565275, %v62
    %v64 = vshll.u32 683565275, %v61
    %v65 = vshrl.u32 2475754826, %v62
    %v66 = vor.u32 %v64, %v65
    %v67 = vshll.u32 2475754826, %v61
    %v68 = vshrl.u32 2131351028, %v62
    %v69 = vor.u32 %v67, %v68
    %v70 = vshll.u32 2131351028, %v61
    %v71 = vshrl.u32 2102212464, %v62
    %v72 = vor.u32 %v70, %v71
    %v73 = vshll.u32 2102212464, %v61
    %v74 = vshrl.u32 920167782, %v62
    %v75 = vor.u32 %v73, %v74
    %v76 = vshll.u32 920167782, %v61
    %v77 = vshrl.u32 1326507024, %v62
    %v78 = vor.u32 %v76, %v77
    %vm79 = vcmp.lt.s32.totalorder %v60, 1
    %vm80 = vcmp.lt.s32.totalorder %v60, 2
    %vm81 = vcmp.lt.s32.totalorder %v60, 3
    %vm82 = vcmp.lt.s32.totalorder %v60, 4
    %v83 = vsel %vm79, %v63, %v66
    %v84 = vsel %vm82, %v72, 2102212464
    %v85 = vsel %vm81, %v69, %v84
    %v86 = vsel %vm80, %v83, %v85
    %v87 = vsel %vm79, %v66, %v69
    %v88 = vsel %vm82, %v75, 920167782
    %v89 = vsel %vm81, %v72, %v88
    %v90 = vsel %vm80, %v87, %v89
    %v91 = vsel %vm79, %v69, %v72
    %v92 = vsel %vm82, %v78, 1326507024
    %v93 = vsel %vm81, %v75, %v92
    %v94 = vsel %vm80, %v91, %v93
    %v95 = vshll.u32 %v55, 8
    %v96 = vmul.u32.u64.compose %v95, %v94
    %v97 = vextract.low.u32 %v96
    %v98 = vextract.high.u32 %v96
    %v99 = vmul.u32.u64.compose %v95, %v90
    %v100 = vextract.low.u32 %v99
    %v101 = vextract.high.u32 %v99
    %v102 = vmul.u32 %v95, %v86
    %v103 = vadd.s32 %v98, %v100
    %vm104 = vc.u32 %v98, %v100
    %v105 = vadd.s32 %v101, 1
    %v106 = vsel %vm104, %v105, %v101
    %v107 = vadd.s32 %v102, %v106
    %v108 = vadd.s32 %v107, 536870912
    %v109 = vshrl.u32 %v108, 30
    %v110 = vshll.u32 %v109, 30
    %v111 = vsub.s32 %v107, %v110
    %vm112 = vcmp.lt.s32.totalorder %v111, 0
    %v113 = vsub.s32 0, %v111
    %v114 = vsel %vm112, %v113, %v111
    %v115 = vclz %v114
    %v116 = vsub.s32 %v115, 2
    %vm117 = vcmp.gt.s32.totalorder 0, %v116
    %v118 = vsel %vm117, 0, %v116
    %v119 = vsub.s32 32, %v118
    %v120 = vshll.u32 %v111, %v118
    %v121 = vshrl.u32 %v103, %v119
    %v122 = vor.u32 %v120, %v121
    %v123 = vsub.s32 4294967266, %v118
    %v124 = vadd.s32 %v123, 127
    %v125 = vshll.u32 %v124, 23
    %v126 = vor.u32 4788187, %v125
    %v127 = vand.u32 2147483647, %v126
    %v129 = vcvt.s32.f32 %v122
    %v130 = vmul.f32 %v129, %v127
    %v131 = vxor.u32 %v130, 2147483648
    %v132 = vsel %vm49, %v131, %v130
    %v133 = vsub.s32 4, %v109
    %v134 = vsel %vm49, %v133, %v109
    %v135 = vsel %vm48, %v46, %v132
    %v136 = vsel %vm48, 0, %v134
    %v137 = vcosq.f32.pop %v135
    %v138 = vsinq.f32.pop %v135
    %vm139 = vweird.f32 %v46
    %v140 = vadd.s32 %v136, 3
    %v141 = vand.u32 %v140, 3
    %vm142 = vcmp.lt.s32.totalorder %v141, 2
    %vm143 = vcmp.eq.s32.totalorder %v141, 0
    %v144 = vxor.u32 %v138, 2147483648
    %v145 = vsel %vm143, %v137, %v144
    %vm146 = vcmp.eq.s32.totalorder %v141, 2
    %v147 = vxor.u32 %v137, 2147483648
    %v148 = vsel %vm146, %v147, %v138
    %v149 = vsel %vm142, %v145, %v148
    %v150 = vsel %vm139, nan, %v149
    %151 = vst [vmem:[#allocation5] sm:$0xff] %v150
    // Predicated region
    $region10: #{tpu_custom_call.1} parent=1 // pred_check
      _
    $region11: #{tpu_custom_call.1} parent=1 // pred_check_branch
      %153 = sbr.rel (0) target = $region13
    $region12: #{tpu_custom_call.1} parent=1 // pred_region
      %s155 = ssub.s32 128, 128
      %156 = vsyncadd [#allocation4], %s155
      %s158 = sshll.u32 [#allocation5], 4
      %s159 = int_to_ptr.vmem [resolvable:$true] %s158
      %161 = dma.vmem_to_hbm [thread:$0]  %s159, 128, %s1, [#allocation4]
    $region13: #{tpu_custom_call.1} parent=1 // pred_fallthru
      _
    // Predicated region
    $region14: #{tpu_custom_call.1} parent=1 // pred_check
      _
    $region15: #{tpu_custom_call.1} parent=1 // pred_check_branch
      %163 = sbr.rel (0) target = $region17
    $region16: #{tpu_custom_call.1} parent=1 // pred_region
      %164 = dma.done [#allocation4], 128
    $region17: #{tpu_custom_call.1} parent=1 // pred_fallthru
      _
    %165 = vsyncpa [#allocation3], 1
    %166 = vsyncpa [#allocation4], 1

</llo_original>
